<compile_context>
chip_gen: v5e
topology: v5e:2x2
jax: 0.10.0
libtpu: 0.0.40
codegen_flags: <defaults>
</compile_context>

<pallas_src>
import jax
import jax.numpy as jnp
from jax.experimental import pallas as pl
from jax.experimental.pallas import tpu as pltpu

_LANE = 128


def _concat_dma_kernel(*args):
    """args = (*in_hbm_refs, out_hbm_ref, dma_sems).

    Each input ref is (N, rows_i, lane) in HBM; the output ref is
    (N, rows_total, lane) in HBM.  The concat is a handful of strided
    HBM->HBM DMAs: start them all, then wait on all of them.
    """
    *in_refs, o_ref, sems = args
    copies = []
    off = 0
    for i, r in enumerate(in_refs):
        rows = r.shape[1]
        cp = pltpu.make_async_copy(
            r, o_ref.at[:, off:off + rows, :], sems.at[i])
        cp.start()
        copies.append(cp)
        off += rows
    for cp in copies:
        cp.wait()


@jax.jit
def concat_channels(*xs):
    """torch.cat(list(xs), dim=1) for NCHW tensors, via HBM->HBM DMAs."""
    N, _, H, W = xs[0].shape
    dtype = xs[0].dtype
    hw = H * W

    chans = []
    for x in xs:
        n, c, h, w = x.shape
        if (n, h, w) != (N, H, W):
            raise ValueError(
                f"Concat dim=1 requires matching N/H/W; got {x.shape} vs "
                f"{(N, '*', H, W)}")
        if x.dtype != dtype:
            raise ValueError(f"dtype mismatch: {x.dtype} vs {dtype}")
        chans.append(int(c))
    c_total = sum(chans)

    # Lane-dense flattening (free row-major reshape, no transpose): prefer a
    # 128-wide last dim whenever every input's per-batch slab is divisible by
    # 128; otherwise fall back to lane = H*W (still a plain strided DMA).
    if all((c * hw) % _LANE == 0 for c in chans):
        lane = _LANE
    else:
        lane = hw
    rows = [c * hw // lane for c in chans]
    rows_total = c_total * hw // lane

    xs_flat = [x.reshape(N, r, lane) for x, r in zip(xs, rows)]

    total_bytes = sum(x.size * x.dtype.itemsize for x in xs)

    out_flat = pl.pallas_call(
        _concat_dma_kernel,
        out_shape=jax.ShapeDtypeStruct((N, rows_total, lane), dtype),
        in_specs=[pl.BlockSpec(memory_space=pl.ANY) for _ in xs_flat],
        out_specs=pl.BlockSpec(memory_space=pl.ANY),
        scratch_shapes=[pltpu.SemaphoreType.DMA((len(xs_flat),))],
        cost_estimate=pl.CostEstimate(
            flops=0, transcendentals=0, bytes_accessed=2 * total_bytes),
    )(*xs_flat)

    return out_flat.reshape(N, c_total, H, W)


if __name__ == "__main__":
    # Small shapes consistent with a YOLO-style channel concat:
    # three NCHW feature maps with 4 / 8 / 4 channels, batch 2.
    N = 2
    chans = (4, 8, 4)
    key = jax.random.PRNGKey(0)
    keys = jax.random.split(key, 2 * len(chans))

    # Path 1: 128-divisible slabs (lane = 128).
    H, W = 16, 16
    xs = [jax.random.normal(k, (N, c, H, W), jnp.float32)
          for k, c in zip(keys[:len(chans)], chans)]
    out = jax.block_until_ready(concat_channels(*xs))
    ref = jnp.concatenate(xs, axis=1)
    assert out.shape == (N, sum(chans), H, W)
    assert bool(jnp.array_equal(out, ref)), "mismatch (lane=128 path)"

    # Path 2: non-128-divisible fallback (lane = H*W), per review request.
    H2, W2 = 13, 13
    xs2 = [jax.random.normal(k, (N, c, H2, W2), jnp.float32)
           for k, c in zip(keys[len(chans):], chans)]
    out2 = jax.block_until_ready(concat_channels(*xs2))
    ref2 = jnp.concatenate(xs2, axis=1)
    assert out2.shape == (N, sum(chans), H2, W2)
    assert bool(jnp.array_equal(out2, ref2)), "mismatch (fallback path)"

    print("KERNEL_OK")
</pallas_src>

<mosaic_0001>
module attributes {stable_mosaic.version = 11 : i64} {
  func.func @_concat_dma_kernel(%arg0: memref<2x8x128xf32, #tpu.memory_space<any>>, %arg1: memref<2x16x128xf32, #tpu.memory_space<any>>, %arg2: memref<2x8x128xf32, #tpu.memory_space<any>>, %arg3: memref<2x32x128xf32, #tpu.memory_space<any>>, %arg4: memref<3x!tpu.dma_semaphore, #tpu.memory_space<semaphore_mem>>) attributes {dimension_semantics = [], scalar_prefetch = 0 : i64, scratch_operands = 1 : i64, tpu.core_type = #tpu.core_type<tc>} {
    %c0_i32 = arith.constant 0 : i32
    %c0_i32_0 = arith.constant 0 : i32
    %c0_i32_1 = arith.constant 0 : i32
    %c0_i32_2 = arith.constant 0 : i32
    %0 = tpu.memref_slice %arg3[%c0_i32_0, %c0_i32_1, %c0_i32_2] : memref<2x32x128xf32, #tpu.memory_space<any>> -> memref<2x8x128xf32, #tpu.memory_space<any>>
    %1 = tpu.memref_slice %arg4[%c0_i32] : memref<3x!tpu.dma_semaphore, #tpu.memory_space<semaphore_mem>> -> memref<1x!tpu.dma_semaphore, #tpu.memory_space<semaphore_mem>>
    %2 = tpu.memref_squeeze %1 : memref<1x!tpu.dma_semaphore, #tpu.memory_space<semaphore_mem>> -> memref<!tpu.dma_semaphore, #tpu.memory_space<semaphore_mem>>
    tpu.enqueue_dma source(%arg0 : memref<2x8x128xf32, #tpu.memory_space<any>>) target(%0 : memref<2x8x128xf32, #tpu.memory_space<any>>) target_semaphore(%2 : memref<!tpu.dma_semaphore, #tpu.memory_space<semaphore_mem>>)
    %c1_i32 = arith.constant 1 : i32
    %c0_i32_3 = arith.constant 0 : i32
    %c8_i32 = arith.constant 8 : i32
    %c0_i32_4 = arith.constant 0 : i32
    %3 = tpu.memref_slice %arg3[%c0_i32_3, %c8_i32, %c0_i32_4] : memref<2x32x128xf32, #tpu.memory_space<any>> -> memref<2x16x128xf32, #tpu.memory_space<any>>
    %4 = tpu.memref_slice %arg4[%c1_i32] : memref<3x!tpu.dma_semaphore, #tpu.memory_space<semaphore_mem>> -> memref<1x!tpu.dma_semaphore, #tpu.memory_space<semaphore_mem>>
    %5 = tpu.memref_squeeze %4 : memref<1x!tpu.dma_semaphore, #tpu.memory_space<semaphore_mem>> -> memref<!tpu.dma_semaphore, #tpu.memory_space<semaphore_mem>>
    tpu.enqueue_dma source(%arg1 : memref<2x16x128xf32, #tpu.memory_space<any>>) target(%3 : memref<2x16x128xf32, #tpu.memory_space<any>>) target_semaphore(%5 : memref<!tpu.dma_semaphore, #tpu.memory_space<semaphore_mem>>)
    %c2_i32 = arith.constant 2 : i32
    %c0_i32_5 = arith.constant 0 : i32
    %c24_i32 = arith.constant 24 : i32
    %c0_i32_6 = arith.constant 0 : i32
    %6 = tpu.memref_slice %arg3[%c0_i32_5, %c24_i32, %c0_i32_6] : memref<2x32x128xf32, #tpu.memory_space<any>> -> memref<2x8x128xf32, #tpu.memory_space<any>>
    %7 = tpu.memref_slice %arg4[%c2_i32] : memref<3x!tpu.dma_semaphore, #tpu.memory_space<semaphore_mem>> -> memref<1x!tpu.dma_semaphore, #tpu.memory_space<semaphore_mem>>
    %8 = tpu.memref_squeeze %7 : memref<1x!tpu.dma_semaphore, #tpu.memory_space<semaphore_mem>> -> memref<!tpu.dma_semaphore, #tpu.memory_space<semaphore_mem>>
    tpu.enqueue_dma source(%arg2 : memref<2x8x128xf32, #tpu.memory_space<any>>) target(%6 : memref<2x8x128xf32, #tpu.memory_space<any>>) target_semaphore(%8 : memref<!tpu.dma_semaphore, #tpu.memory_space<semaphore_mem>>)
    %c0_i32_7 = arith.constant 0 : i32
    %c0_i32_8 = arith.constant 0 : i32
    %c0_i32_9 = arith.constant 0 : i32
    %c0_i32_10 = arith.constant 0 : i32
    %9 = tpu.memref_slice %arg3[%c0_i32_8, %c0_i32_9, %c0_i32_10] : memref<2x32x128xf32, #tpu.memory_space<any>> -> memref<2x8x128xf32, #tpu.memory_space<any>>
    %10 = tpu.memref_slice %arg4[%c0_i32_7] : memref<3x!tpu.dma_semaphore, #tpu.memory_space<semaphore_mem>> -> memref<1x!tpu.dma_semaphore, #tpu.memory_space<semaphore_mem>>
    %11 = tpu.memref_squeeze %10 : memref<1x!tpu.dma_semaphore, #tpu.memory_space<semaphore_mem>> -> memref<!tpu.dma_semaphore, #tpu.memory_space<semaphore_mem>>
    tpu.wait_dma2 semaphore(%11 : memref<!tpu.dma_semaphore, #tpu.memory_space<semaphore_mem>>) src(%arg0 : memref<2x8x128xf32, #tpu.memory_space<any>>) dst(%9 : memref<2x8x128xf32, #tpu.memory_space<any>>)
    %c1_i32_11 = arith.constant 1 : i32
    %c0_i32_12 = arith.constant 0 : i32
    %c8_i32_13 = arith.constant 8 : i32
    %c0_i32_14 = arith.constant 0 : i32
    %12 = tpu.memref_slice %arg3[%c0_i32_12, %c8_i32_13, %c0_i32_14] : memref<2x32x128xf32, #tpu.memory_space<any>> -> memref<2x16x128xf32, #tpu.memory_space<any>>
    %13 = tpu.memref_slice %arg4[%c1_i32_11] : memref<3x!tpu.dma_semaphore, #tpu.memory_space<semaphore_mem>> -> memref<1x!tpu.dma_semaphore, #tpu.memory_space<semaphore_mem>>
    %14 = tpu.memref_squeeze %13 : memref<1x!tpu.dma_semaphore, #tpu.memory_space<semaphore_mem>> -> memref<!tpu.dma_semaphore, #tpu.memory_space<semaphore_mem>>
    tpu.wait_dma2 semaphore(%14 : memref<!tpu.dma_semaphore, #tpu.memory_space<semaphore_mem>>) src(%arg1 : memref<2x16x128xf32, #tpu.memory_space<any>>) dst(%12 : memref<2x16x128xf32, #tpu.memory_space<any>>)
    %c2_i32_15 = arith.constant 2 : i32
    %c0_i32_16 = arith.constant 0 : i32
    %c24_i32_17 = arith.constant 24 : i32
    %c0_i32_18 = arith.constant 0 : i32
    %15 = tpu.memref_slice %arg3[%c0_i32_16, %c24_i32_17, %c0_i32_18] : memref<2x32x128xf32, #tpu.memory_space<any>> -> memref<2x8x128xf32, #tpu.memory_space<any>>
    %16 = tpu.memref_slice %arg4[%c2_i32_15] : memref<3x!tpu.dma_semaphore, #tpu.memory_space<semaphore_mem>> -> memref<1x!tpu.dma_semaphore, #tpu.memory_space<semaphore_mem>>
    %17 = tpu.memref_squeeze %16 : memref<1x!tpu.dma_semaphore, #tpu.memory_space<semaphore_mem>> -> memref<!tpu.dma_semaphore, #tpu.memory_space<semaphore_mem>>
    tpu.wait_dma2 semaphore(%17 : memref<!tpu.dma_semaphore, #tpu.memory_space<semaphore_mem>>) src(%arg2 : memref<2x8x128xf32, #tpu.memory_space<any>>) dst(%15 : memref<2x8x128xf32, #tpu.memory_space<any>>)
    return
  }
}

</mosaic_0001>

<llo_original>
// kernel: concat_channels.1
$region0: #{concat_channels.1}
  #allocation0 [shape = 'u32[]', space=smem, size = 0x4, offset = 0x4, fixed_abs, tag = 'smem constant byte address 0x4 - core index']
  #allocation1 [shape = 'u32[72,128]{1,0:T(1,128)}', space=vmem, size = 0x9000, scoped, tag = 'internal scratch']
  #allocation2 [shape = 's32[3]{0}', space=sflag, size = 0xc, scoped, tag = 'scratch operand']
  #allocation3 [shape = 's32[]', space=sflag, size = 0x4, offset = 0, fixed_abs, tag = 'sflag constant byte address 0x0 - dummy sync flag']
  #allocation4 [shape = 's32[]', space=sflag, size = 0x4, offset = 0, fixed_abs, tag = 'sflag constant byte address 0x0 - dummy sync flag']
  #allocation5 [shape = 's32[]', space=sflag, size = 0x4, offset = 0, fixed_abs, tag = 'sflag constant byte address 0x0 - dummy sync flag']
  %s0 = inlined_call_operand.vmem [shape: f32[2,8,128], index: 0, kind: input, shape index: {}]
  %s1 = inlined_call_operand.vmem [shape: f32[2,16,128], index: 1, kind: input, shape index: {}]
  %s2 = inlined_call_operand.vmem [shape: f32[2,8,128], index: 2, kind: input, shape index: {}]
  %s3 = inlined_call_operand.vmem [shape: f32[2,32,128], index: 3, kind: output, shape index: {}]
  %s4 = sld [smem:[#allocation0]]
  $region89: #{concat_channels.1} parent=0
    _
  %s6 = ssub.s32 1, %s4
  %s7 = scalar_select 0, %s6, %s4
  // Predicated region
  $region2: #{concat_channels.1} parent=0 // pred_check
    _
  $region3: #{concat_channels.1} parent=0 // pred_check_branch
    %9 = sbr.rel (0) target = $region5
  $region4: #{concat_channels.1} parent=0 // pred_region
    // Predicated region
    $region17: #{concat_channels.1} parent=4 // pred_check
      _
    $region18: #{concat_channels.1} parent=4 // pred_check_branch
      %27 = sbr.rel (0) target = $region20
    $region19: #{concat_channels.1} parent=4 // pred_region
      loop: start=0, step=1, limit=1
      $region21: #{concat_channels.1} parent=19 // loop_pre_header
        _
      $region22: #{concat_channels.1} parent=19 // loop_header
        %s29 = sphi 0, %s33
        %p30 = scmp.ge.s32.totalorder %s29, 1
        %s34 = sphi %s0, %s0
        %s35 = sphi %s3, %s3
      $region23: #{concat_channels.1} parent=19 // loop_header_branch
        %32 = sbr.rel (%p30) target = $region27
      $region24: #{concat_channels.1} parent=19 // loop_body
        %v36 = vld [vmem:[%s34] sm:$0xff]
        %37 = vst [vmem:[%s35] sm:$0xff] %v36
        %v38 = vld [vmem:[%s34 + $0x8] sm:$0xff]
        %39 = vst [vmem:[%s35 + $0x20] sm:$0xff] %v38
      $region25: #{concat_channels.1} parent=19 // loop_footer
        %s33 = sadd.s32 1, %s29
      $region26: #{concat_channels.1} parent=19 // loop_footer_branch
        %28 = sbr.rel target = $region22
      $region27: #{concat_channels.1} parent=19 // loop_exit
        _
    $region20: #{concat_channels.1} parent=4 // pred_fallthru
      _
    // Predicated region
    $region28: #{concat_channels.1} parent=4 // pred_check
      _
    $region29: #{concat_channels.1} parent=4 // pred_check_branch
      %41 = sbr.rel target = $region31
    $region30: #{concat_channels.1} parent=4 // pred_region
      _
    $region31: #{concat_channels.1} parent=4 // pred_fallthru
      _
  $region5: #{concat_channels.1} parent=0 // pred_fallthru
    _
  // Predicated region
  $region6: #{concat_channels.1} parent=0 // pred_check
    _
  $region7: #{concat_channels.1} parent=0 // pred_check_branch
    %11 = sbr.rel target = $region9
  $region8: #{concat_channels.1} parent=0 // pred_region
    %s13 = ssub.s32 256, 1
    loop: start=0, step=1, limit=1
    $region10: #{concat_channels.1} parent=8 // loop_pre_header
      _
    $region11: #{concat_channels.1} parent=8 // loop_header
      %s15 = sphi 0, %s19
      %p16 = scmp.ge.s32.totalorder %s15, 1
      %s20 = sphi %s0, %s0
      %s21 = sphi %s3, %s3
    $region12: #{concat_channels.1} parent=8 // loop_header_branch
      %18 = sbr.rel (%p16) target = $region16
    $region13: #{concat_channels.1} parent=8 // loop_body
      %v22 = vld [vmem:[%s20] sm:%s13]
      %23 = vst [vmem:[%s21] sm:%s13] %v22
      %v24 = vld [vmem:[%s20 + $0x8] sm:%s13]
      %25 = vst [vmem:[%s21 + $0x20] sm:%s13] %v24
    $region14: #{concat_channels.1} parent=8 // loop_footer
      %s19 = sadd.s32 1, %s15
    $region15: #{concat_channels.1} parent=8 // loop_footer_branch
      %14 = sbr.rel target = $region11
    $region16: #{concat_channels.1} parent=8 // loop_exit
      _
  $region9: #{concat_channels.1} parent=0 // pred_fallthru
    _
  // Predicated region
  $region32: #{concat_channels.1} parent=0 // pred_check
    _
  $region33: #{concat_channels.1} parent=0 // pred_check_branch
    %44 = sbr.rel (0) target = $region35
  $region34: #{concat_channels.1} parent=0 // pred_region
    %45 = vsyncadd [#allocation2], 256
  $region35: #{concat_channels.1} parent=0 // pred_fallthru
    _
  %s46 = scalar_lea.vmem %s3, 8
  %s47 = scalar_lea.sflag [#allocation2], 1
  // Predicated region
  $region36: #{concat_channels.1} parent=0 // pred_check
    _
  $region37: #{concat_channels.1} parent=0 // pred_check_branch
    %49 = sbr.rel (0) target = $region39
  $region38: #{concat_channels.1} parent=0 // pred_region
    loop: start=0, step=1, limit=1
    $region40: #{concat_channels.1} parent=38 // loop_pre_header
      _
    $region41: #{concat_channels.1} parent=38 // loop_header
      %s51 = sphi 0, %s55
      %p52 = scmp.ge.s32.totalorder %s51, 1
      %s56 = sphi %s1, %s1
      %s57 = sphi %s46, %s46
    $region42: #{concat_channels.1} parent=38 // loop_header_branch
      %54 = sbr.rel (%p52) target = $region46
    $region43: #{concat_channels.1} parent=38 // loop_body
      %v58 = vld [vmem:[%s56] sm:$0xff]
      %59 = vst [vmem:[%s57] sm:$0xff] %v58
      %v60 = vld [vmem:[%s56 + $0x8] sm:$0xff]
      %61 = vst [vmem:[%s57 + $0x8] sm:$0xff] %v60
      %v62 = vld [vmem:[%s56 + $0x10] sm:$0xff]
      %63 = vst [vmem:[%s57 + $0x20] sm:$0xff] %v62
      %v64 = vld [vmem:[%s56 + $0x18] sm:$0xff]
      %65 = vst [vmem:[%s57 + $0x28] sm:$0xff] %v64
    $region44: #{concat_channels.1} parent=38 // loop_footer
      %s55 = sadd.s32 1, %s51
    $region45: #{concat_channels.1} parent=38 // loop_footer_branch
      %50 = sbr.rel target = $region41
    $region46: #{concat_channels.1} parent=38 // loop_exit
      _
  $region39: #{concat_channels.1} parent=0 // pred_fallthru
    _
  // Predicated region
  $region47: #{concat_channels.1} parent=0 // pred_check
    _
  $region48: #{concat_channels.1} parent=0 // pred_check_branch
    %67 = sbr.rel target = $region50
  $region49: #{concat_channels.1} parent=0 // pred_region
    _
  $region50: #{concat_channels.1} parent=0 // pred_fallthru
    _
  // Predicated region
  $region51: #{concat_channels.1} parent=0 // pred_check
    _
  $region52: #{concat_channels.1} parent=0 // pred_check_branch
    %70 = sbr.rel (0) target = $region54
  $region53: #{concat_channels.1} parent=0 // pred_region
    %71 = vsyncadd %s47, 512
  $region54: #{concat_channels.1} parent=0 // pred_fallthru
    _
  %s72 = scalar_lea.vmem %s3, 24
  %s73 = scalar_lea.sflag [#allocation2], 2
  // Predicated region
  $region55: #{concat_channels.1} parent=0 // pred_check
    _
  $region56: #{concat_channels.1} parent=0 // pred_check_branch
    %75 = sbr.rel (0) target = $region58
  $region57: #{concat_channels.1} parent=0 // pred_region
    // Predicated region
    $region70: #{concat_channels.1} parent=57 // pred_check
      _
    $region71: #{concat_channels.1} parent=57 // pred_check_branch
      %93 = sbr.rel (0) target = $region73
    $region72: #{concat_channels.1} parent=57 // pred_region
      loop: start=0, step=1, limit=1
      $region74: #{concat_channels.1} parent=72 // loop_pre_header
        _
      $region75: #{concat_channels.1} parent=72 // loop_header
        %s95 = sphi 0, %s99
        %p96 = scmp.ge.s32.totalorder %s95, 1
        %s100 = sphi %s2, %s2
        %s101 = sphi %s72, %s72
      $region76: #{concat_channels.1} parent=72 // loop_header_branch
        %98 = sbr.rel (%p96) target = $region80
      $region77: #{concat_channels.1} parent=72 // loop_body
        %v102 = vld [vmem:[%s100] sm:$0xff]
        %103 = vst [vmem:[%s101] sm:$0xff] %v102
        %v104 = vld [vmem:[%s100 + $0x8] sm:$0xff]
        %105 = vst [vmem:[%s101 + $0x20] sm:$0xff] %v104
      $region78: #{concat_channels.1} parent=72 // loop_footer
        %s99 = sadd.s32 1, %s95
      $region79: #{concat_channels.1} parent=72 // loop_footer_branch
        %94 = sbr.rel target = $region75
      $region80: #{concat_channels.1} parent=72 // loop_exit
        _
    $region73: #{concat_channels.1} parent=57 // pred_fallthru
      _
    // Predicated region
    $region81: #{concat_channels.1} parent=57 // pred_check
      _
    $region82: #{concat_channels.1} parent=57 // pred_check_branch
      %107 = sbr.rel target = $region84
    $region83: #{concat_channels.1} parent=57 // pred_region
      _
    $region84: #{concat_channels.1} parent=57 // pred_fallthru
      _
  $region58: #{concat_channels.1} parent=0 // pred_fallthru
    _
  // Predicated region
  $region59: #{concat_channels.1} parent=0 // pred_check
    _
  $region60: #{concat_channels.1} parent=0 // pred_check_branch
    %77 = sbr.rel target = $region62
  $region61: #{concat_channels.1} parent=0 // pred_region
    %s79 = ssub.s32 256, 1
    loop: start=0, step=1, limit=1
    $region63: #{concat_channels.1} parent=61 // loop_pre_header
      _
    $region64: #{concat_channels.1} parent=61 // loop_header
      %s81 = sphi 0, %s85
      %p82 = scmp.ge.s32.totalorder %s81, 1
      %s86 = sphi %s2, %s2
      %s87 = sphi %s72, %s72
    $region65: #{concat_channels.1} parent=61 // loop_header_branch
      %84 = sbr.rel (%p82) target = $region69
    $region66: #{concat_channels.1} parent=61 // loop_body
      %v88 = vld [vmem:[%s86] sm:%s79]
      %89 = vst [vmem:[%s87] sm:%s79] %v88
      %v90 = vld [vmem:[%s86 + $0x8] sm:%s79]
      %91 = vst [vmem:[%s87 + $0x20] sm:%s79] %v90
    $region67: #{concat_channels.1} parent=61 // loop_footer
      %s85 = sadd.s32 1, %s81
    $region68: #{concat_channels.1} parent=61 // loop_footer_branch
      %80 = sbr.rel target = $region64
    $region69: #{concat_channels.1} parent=61 // loop_exit
      _
  $region62: #{concat_channels.1} parent=0 // pred_fallthru
    _
  // Predicated region
  $region85: #{concat_channels.1} parent=0 // pred_check
    _
  $region86: #{concat_channels.1} parent=0 // pred_check_branch
    %110 = sbr.rel (0) target = $region88
  $region87: #{concat_channels.1} parent=0 // pred_region
    %111 = vsyncadd %s73, 256
  $region88: #{concat_channels.1} parent=0 // pred_fallthru
    _
  %s112 = smul.u32 2, 8
  %s113 = smul.u32 %s112, 1
  %s114 = sshll.u32 %s113, 4
  %115 = dma.done [#allocation2], %s114
  %s116 = smul.u32 2, 16
  %s117 = smul.u32 %s116, 1
  %s118 = sshll.u32 %s117, 4
  %119 = dma.done %s47, %s118
  %s120 = sshll.u32 %s113, 4
  %121 = dma.done %s73, %s120
  %122 = vsyncmov [#allocation2]
  %s123 = vpop.sfrf %122
  %p124 = scmp.eq.s32.totalorder %s123, 0
  %p125 = pneg %p124
  %127 = shalt.err (%p125)
  %s128 = scalar_lea.sflag [#allocation2], 1
  %129 = vsyncmov %s128
  %s130 = vpop.sfrf %129
  %p131 = scmp.eq.s32.totalorder %s130, 0
  %p132 = pneg %p131
  %134 = shalt.err (%p132)
  %s135 = scalar_lea.sflag [#allocation2], 2
  %136 = vsyncmov %s135
  %s137 = vpop.sfrf %136
  %p138 = scmp.eq.s32.totalorder %s137, 0
  %p139 = pneg %p138
  %141 = shalt.err (%p139)

</llo_original>
